<compile_context>
chip_gen: v7x
topology: tpu7x:2x2x1
jax: 0.10.0
libtpu: 0.0.40
codegen_flags: <defaults>
</compile_context>

<pallas_src>
import jax
import jax.numpy as jnp
from jax.experimental import pallas as pl
from jax.experimental.pallas import tpu as pltpu


def _stats_kernel(x_ref, sumx_ref, gram_ref):
    # x_ref: (C_in, TN)   sumx_ref: (C_in, 1)   gram_ref: (C_in, C_in)
    @pl.when((pl.program_id(0) == 0) & (pl.program_id(1) == 0))
    def _():
        sumx_ref[...] = jnp.zeros_like(sumx_ref)
        gram_ref[...] = jnp.zeros_like(gram_ref)

    x = x_ref[...].astype(jnp.float32)
    sumx_ref[...] += jnp.sum(x, axis=1, keepdims=True)
    # X @ X^T, contracting the lane (point) axis — runs on the MXU.
    gram_ref[...] += jax.lax.dot_general(
        x, x, (((1,), (1,)), ((), ())), preferred_element_type=jnp.float32)


def _apply_kernel(x_ref, w_ref, b_ref, o_ref):
    # x_ref: (C_in, TN)  w_ref: (C_out, C_in)  b_ref: (C_out, 1)  o_ref: (C_out, TN)
    x = x_ref[...].astype(jnp.float32)
    y = jnp.dot(w_ref[...], x, preferred_element_type=jnp.float32)
    y = y + b_ref[...]                      # folded BN shift (beta - mean*scale)
    o_ref[...] = jnp.maximum(y, 0.0).astype(o_ref.dtype)


def _pick_tile_n(n, max_tile=2048):
    """Largest multiple-of-128 lane tile that divides N; falls back to full N."""
    if n % 128 != 0:
        return n
    best, t = 128, 256
    while t <= min(n, max_tile):
        if n % t == 0:
            best = t
        t += 128
    return best


def fc_layer_forward(x, w, b, gamma, beta, *, tile_n=None, eps=1e-5):
    """x: (B, C_in, N) -> (B, C_out, N). Params: w (C_out, C_in), b/gamma/beta (C_out,)."""
    B, C_in, N = x.shape
    C_out = w.shape[0]
    del b  # Linear bias is exactly cancelled by training-mode BN mean subtraction.

    if tile_n is None:
        tile_n = _pick_tile_n(N)
    assert N % tile_n == 0, (N, tile_n)
    grid = (B, N // tile_n)

    # ---- Pass 1: per-channel-of-x sum and Gram over all B*N points (accumulators).
    sum_x, gram = pl.pallas_call(
        _stats_kernel,
        out_shape=(jax.ShapeDtypeStruct((C_in, 1), jnp.float32),
                   jax.ShapeDtypeStruct((C_in, C_in), jnp.float32)),
        grid_spec=pltpu.PrefetchScalarGridSpec(
            num_scalar_prefetch=0,
            grid=grid,
            in_specs=[pl.BlockSpec((pl.Squeezed(), C_in, tile_n),
                                   lambda bi, ni: (bi, 0, ni))],
            out_specs=(pl.BlockSpec((C_in, 1), lambda bi, ni: (0, 0)),
                       pl.BlockSpec((C_in, C_in), lambda bi, ni: (0, 0)))),
        compiler_params=pltpu.CompilerParams(
            dimension_semantics=("arbitrary", "arbitrary")),
    )(x)

    # ---- Fold the BatchNorm (biased batch variance, eps) into the Linear weights.
    count = jnp.float32(B * N)
    w32 = w.astype(jnp.float32)
    mean_x = sum_x / count                                              # (C_in, 1)
    mean_y = w32 @ mean_x                                               # (C_out, 1)
    ey2 = jnp.sum((w32 @ (gram / count)) * w32, axis=1, keepdims=True)  # diag(W G W^T)
    var_y = jnp.maximum(ey2 - jnp.square(mean_y), 0.0)                  # (C_out, 1)
    scale = gamma.astype(jnp.float32).reshape(C_out, 1) * jax.lax.rsqrt(var_y + eps)
    w_fold = w32 * scale                                                # (C_out, C_in)
    b_fold = beta.astype(jnp.float32).reshape(C_out, 1) - mean_y * scale

    # ---- Pass 2: relu(W' @ x + b') straight into the (B, C_out, N) output layout.
    out = pl.pallas_call(
        _apply_kernel,
        out_shape=jax.ShapeDtypeStruct((B, C_out, N), jnp.float32),
        grid_spec=pltpu.PrefetchScalarGridSpec(
            num_scalar_prefetch=0,
            grid=grid,
            in_specs=[pl.BlockSpec((pl.Squeezed(), C_in, tile_n),
                                   lambda bi, ni: (bi, 0, ni)),
                      pl.BlockSpec((C_out, C_in), lambda bi, ni: (0, 0)),
                      pl.BlockSpec((C_out, 1), lambda bi, ni: (0, 0))],
            out_specs=pl.BlockSpec((pl.Squeezed(), C_out, tile_n),
                                   lambda bi, ni: (bi, 0, ni))),
        compiler_params=pltpu.CompilerParams(
            dimension_semantics=("parallel", "parallel")),
    )(x, w_fold, b_fold)
    return out


def fc_layer_reference(x, w, b, gamma, beta, eps=1e-5):
    """Pure-JAX reference mirroring the PyTorch module (training-mode BN)."""
    y = jnp.einsum("oc,bcn->bon", w, x) + b[None, :, None]
    mean = jnp.mean(y, axis=(0, 2), keepdims=True)
    var = jnp.mean(jnp.square(y - mean), axis=(0, 2), keepdims=True)
    y_hat = (y - mean) / jnp.sqrt(var + eps)
    return jnp.maximum(y_hat * gamma[None, :, None] + beta[None, :, None], 0.0)


if __name__ == "__main__":
    B, C_in, C_out, N = 2, 16, 32, 256

    key = jax.random.PRNGKey(0)
    kx, kw, kb = jax.random.split(key, 3)

    x = jax.random.normal(kx, (B, C_in, N), dtype=jnp.float32)
    # nn.Linear(in, out, bias=True) + BatchNorm1d(out) with weight=1, bias=0.
    w = jax.random.normal(kw, (C_out, C_in), dtype=jnp.float32) * (1.0 / jnp.sqrt(C_in))
    b = jax.random.normal(kb, (C_out,), dtype=jnp.float32) * 0.1
    gamma = jnp.ones((C_out,), dtype=jnp.float32)
    beta = jnp.zeros((C_out,), dtype=jnp.float32)

    out = fc_layer_forward(x, w, b, gamma, beta, tile_n=128)  # grid = (2, 2)
    out = jax.block_until_ready(out)

    ref = fc_layer_reference(x, w, b, gamma, beta)
    assert out.shape == (B, C_out, N), out.shape
    err = float(jnp.max(jnp.abs(out - ref)))
    assert jnp.allclose(out, ref, atol=1e-4, rtol=1e-4), err

    print("KERNEL_OK")
</pallas_src>

<mosaic_0001>
module attributes {stable_mosaic.version = 11 : i64} {
  func.func @_stats_kernel(%arg0: i32, %arg1: i32, %arg2: memref<1x16x128xf32, #tpu.memory_space<vmem>>, %arg3: memref<16x1xf32, #tpu.memory_space<vmem>>, %arg4: memref<16x16xf32, #tpu.memory_space<vmem>>) attributes {dimension_semantics = [#tpu.dimension_semantics<arbitrary>, #tpu.dimension_semantics<arbitrary>], iteration_bounds = array<i64: 2, 2>, scalar_prefetch = 0 : i64, scratch_operands = 0 : i64, tpu.core_type = #tpu.core_type<tc>, window_params = [{transform_indices = @transform_0, window_bounds = array<i64: 1, 16, 128>}, {pipeline_mode = #tpu.pipeline_mode<synchronous>, transform_indices = @transform_1, window_bounds = array<i64: 16, 1>}, {pipeline_mode = #tpu.pipeline_mode<synchronous>, transform_indices = @transform_2, window_bounds = array<i64: 16, 16>}]} {
    %c0_i32 = arith.constant 0 : i32
    %0 = arith.cmpi eq, %arg0, %c0_i32 : i32
    %c0_i32_0 = arith.constant 0 : i32
    %1 = arith.cmpi eq, %arg1, %c0_i32_0 : i32
    %2 = arith.andi %0, %1 : i1
    %3 = arith.extui %2 : i1 to i32
    %c0_i32_1 = arith.constant 0 : i32
    %4 = arith.cmpi ne, %3, %c0_i32_1 : i32
    scf.if %4 {
      %cst_13 = arith.constant 0.000000e+00 : f32
      %16 = vector.broadcast %cst_13 : f32 to vector<16x1xf32>
      %c0_14 = arith.constant 0 : index
      %c0_15 = arith.constant 0 : index
      %17 = vector.load %arg3[%c0_14, %c0_15] : memref<16x1xf32, #tpu.memory_space<vmem>>, vector<16x1xf32>
      tpu.vector_store %arg3[%c0_14, %c0_15], %16 {strides = array<i32>} : memref<16x1xf32, #tpu.memory_space<vmem>>, vector<16x1xf32>,
      %cst_16 = arith.constant 0.000000e+00 : f32
      %18 = vector.broadcast %cst_16 : f32 to vector<16x16xf32>
      %c0_17 = arith.constant 0 : index
      %c0_18 = arith.constant 0 : index
      %19 = vector.load %arg4[%c0_17, %c0_18] : memref<16x16xf32, #tpu.memory_space<vmem>>, vector<16x16xf32>
      tpu.vector_store %arg4[%c0_17, %c0_18], %18 {strides = array<i32>} : memref<16x16xf32, #tpu.memory_space<vmem>>, vector<16x16xf32>,
    } else {
    }
    %c0 = arith.constant 0 : index
    %c0_2 = arith.constant 0 : index
    %c0_3 = arith.constant 0 : index
    %5 = vector.load %arg2[%c0, %c0_2, %c0_3] : memref<1x16x128xf32, #tpu.memory_space<vmem>>, vector<1x16x128xf32>
    %6 = vector.shape_cast %5 : vector<1x16x128xf32> to vector<16x128xf32>
    %c0_4 = arith.constant 0 : index
    %c0_5 = arith.constant 0 : index
    %7 = vector.load %arg3[%c0_4, %c0_5] : memref<16x1xf32, #tpu.memory_space<vmem>>, vector<16x1xf32>
    %cst = arith.constant dense<0.000000e+00> : vector<16xf32>
    %8 = vector.multi_reduction <add>, %6, %cst [1] : vector<16x128xf32> to vector<16xf32>
    %9 = vector.shape_cast %8 : vector<16xf32> to vector<16x1xf32>
    %10 = arith.addf %7, %9 : vector<16x1xf32>
    %c0_6 = arith.constant 0 : index
    %c0_7 = arith.constant 0 : index
    %11 = vector.load %arg3[%c0_6, %c0_7] : memref<16x1xf32, #tpu.memory_space<vmem>>, vector<16x1xf32>
    tpu.vector_store %arg3[%c0_6, %c0_7], %10 {strides = array<i32>} : memref<16x1xf32, #tpu.memory_space<vmem>>, vector<16x1xf32>,
    %c0_8 = arith.constant 0 : index
    %c0_9 = arith.constant 0 : index
    %12 = vector.load %arg4[%c0_8, %c0_9] : memref<16x16xf32, #tpu.memory_space<vmem>>, vector<16x16xf32>
    %cst_10 = arith.constant dense<0.000000e+00> : vector<16x16xf32>
    %13 = tpu.matmul %6, %6, %cst_10 {dimension_numbers = #tpu.dot_dimension_numbers<[1], [1], [0], [0], [0, 0, 1, 0], [], []>} : vector<16x128xf32>, vector<16x128xf32>, vector<16x16xf32> -> vector<16x16xf32>
    %14 = arith.addf %12, %13 : vector<16x16xf32>
    %c0_11 = arith.constant 0 : index
    %c0_12 = arith.constant 0 : index
    %15 = vector.load %arg4[%c0_11, %c0_12] : memref<16x16xf32, #tpu.memory_space<vmem>>, vector<16x16xf32>
    tpu.vector_store %arg4[%c0_11, %c0_12], %14 {strides = array<i32>} : memref<16x16xf32, #tpu.memory_space<vmem>>, vector<16x16xf32>,
    return
  }
  func.func @transform_0(%arg0: i32, %arg1: i32) -> (i32, i32, i32) {
    %c0_i32 = arith.constant 0 : i32
    %c0_i32_0 = arith.constant 0 : i32
    return %arg0, %c0_i32, %arg1 : i32, i32, i32
  }
  func.func @transform_1(%arg0: i32, %arg1: i32) -> (i32, i32) {
    %c0_i32 = arith.constant 0 : i32
    %c0_i32_0 = arith.constant 0 : i32
    %c0_i32_1 = arith.constant 0 : i32
    return %c0_i32, %c0_i32_0 : i32, i32
  }
  func.func @transform_2(%arg0: i32, %arg1: i32) -> (i32, i32) {
    %c0_i32 = arith.constant 0 : i32
    %c0_i32_0 = arith.constant 0 : i32
    %c0_i32_1 = arith.constant 0 : i32
    return %c0_i32, %c0_i32_0 : i32, i32
  }
}

</mosaic_0001>

<llo_original>
// kernel: tpu_custom_call.1
$region0: #{tpu_custom_call.1}
  #allocation0 [shape = 'u32[]', space=smem, size = 0x4, offset = 0x4, fixed_abs, tag = 'smem constant byte address 0x4 - core index']
  #allocation1 [shape = 'u32[144,128]{1,0:T(1,128)}', space=vmem, size = 0x12000, scoped, tag = 'internal scratch']
  %s0 = inlined_call_operand.hbm [shape: f32[2,16,256], index: 0, kind: input, shape index: {}]
  %s1 = inlined_call_operand.vmem [shape: f32[16,1], index: 1, kind: output, shape index: {0}]
  %s2 = inlined_call_operand.hbm [shape: f32[16,16], index: 2, kind: output, shape index: {1}]
  %3 = xla_tuple %s1, %s2
  %s4 = sld [smem:[#allocation0]]
  $region53: #{tpu_custom_call.1} parent=0
    _
  %s6 = ssub.s32 1, %s4
  %s7 = scalar_select 0, %s6, %s4
  $region1: #{tpu_custom_call.1} parent=0
    #allocation2 [shape = 'u8[16384]{0}', space=vmem, size = 0x4000, scoped, tag = 'input window, operand 0']
    #allocation3 [shape = 's32[2]{0}', space=sflag, size = 0x8, scoped, tag = 'scoped memory for tpu_custom_call.1']
    #allocation4 [shape = 's32[2]{0}', space=sflag, size = 0x8, scoped, tag = 'scoped memory for tpu_custom_call.1']
    #allocation5 [shape = 'u8[8192]{0}', space=vmem, size = 0x2000, scoped, tag = 'output window, operand 1, single buffered']
    %8 = vsyncpa [#allocation3], 0
    %s9 = scalar_lea.sflag [#allocation3], 1
    %10 = vsyncpa %s9, 0
    %11 = vsyncpa [#allocation4], 0
    loop: start=0, step=1, limit=6
    $region2: #{tpu_custom_call.1} parent=1 // loop_pre_header
      _
    $region3: #{tpu_custom_call.1} parent=1 // loop_header
      %s13 = sphi 0, %s17
      %p14 = scmp.ge.s32.totalorder %s13, 6
      %s20 = sphi 0, %s32
      %s21 = sphi 0, %s28
      %s22 = sphi 0, %s20
      %s23 = sphi 0, %s21
      %s24 = sphi 0, %s22
      %s25 = sphi 0, %s23
      %s37 = sphi 0, %s39
      %s40 = sphi 0, %s37
      %s41 = sphi 0, %s40
      %s57 = sphi 0, %s41
      %s61 = sphi 0, %s61
      %s63 = sphi 0, %s61
      %s64 = sphi 0, %s63
      %s78 = sphi 0, %s64
      %s82 = sphi 0, %s82
      %s84 = sphi 0, %s82
      %s85 = sphi 0, %s84
      %s99 = sphi 0, %s85
    $region4: #{tpu_custom_call.1} parent=1 // loop_header_branch
      %16 = sbr.rel (%p14) target = $region8
    $region5: #{tpu_custom_call.1} parent=1 // loop_body
      %s18 = ssub.s32 %s13, 1
      %s19 = ssub.s32 %s13, 2
      %s26 = sadd.s32 1, %s21
      %p27 = scmp.ge.s32.totalorder %s26, 2
      %s28 = scalar_select %p27, 0, %s26
      %s29 = sadd.s32 1, %s20
      %s30 = scalar_select %p27, %s29, %s20
      %p31 = scmp.ge.s32.totalorder %s30, 2
      %s32 = scalar_select %p31, 0, %s30
      %s33 = ssub.s32 %s20, %s32
      %s34 = ssub.s32 %s21, %s28
      %s35 = sor.u32 %s33, %s34
      %p36 = scmp.eq.s32.totalorder %s35, 0
      %s38 = sadd.s32 %s37, 1
      %s39 = scalar_select %p36, %s37, %s38
      %p42 = pneg %p36
      %p43 = scmp.eq.s32.totalorder %s13, 3
      %p44 = por %p42, %p43
      %p45 = scmp.ne.s32.totalorder %s37, %s40
      %p46 = scmp.eq.s32.totalorder %s13, 0
      %p47 = por %p45, %p46
      %p48 = scmp.ne.s32.totalorder %s37, %s40
      %p49 = scmp.eq.s32.totalorder %s18, 3
      %p50 = por %p48, %p49
      %p51 = scmp.ne.s32.totalorder %s40, %s41
      %p52 = scmp.eq.s32.totalorder %s18, 0
      %p53 = por %p51, %p52
      %p54 = scmp.ne.s32.totalorder %s40, %s41
      %p55 = scmp.eq.s32.totalorder %s19, 3
      %p56 = por %p54, %p55
      %p58 = scmp.ne.s32.totalorder %s41, %s57
      %p59 = scmp.eq.s32.totalorder %s19, 0
      %p60 = por %p58, %p59
      %s62 = sadd.s32 %s61, 1
      %p65 = scmp.eq.s32.totalorder %s13, 3
      %p66 = scmp.ne.s32.totalorder %s61, %s63
      %p67 = scmp.eq.s32.totalorder %s13, 0
      %p68 = por %p66, %p67
      %p69 = scmp.ne.s32.totalorder %s61, %s63
      %p70 = scmp.eq.s32.totalorder %s18, 3
      %p71 = por %p69, %p70
      %p72 = scmp.ne.s32.totalorder %s63, %s64
      %p73 = scmp.eq.s32.totalorder %s18, 0
      %p74 = por %p72, %p73
      %p75 = scmp.ne.s32.totalorder %s63, %s64
      %p76 = scmp.eq.s32.totalorder %s19, 3
      %p77 = por %p75, %p76
      %p79 = scmp.ne.s32.totalorder %s64, %s78
      %p80 = scmp.eq.s32.totalorder %s19, 0
      %p81 = por %p79, %p80
      %s83 = sadd.s32 %s82, 1
      %p86 = scmp.eq.s32.totalorder %s13, 3
      %p87 = scmp.ne.s32.totalorder %s82, %s84
      %p88 = scmp.eq.s32.totalorder %s13, 0
      %p89 = por %p87, %p88
      %p90 = scmp.ne.s32.totalorder %s82, %s84
      %p91 = scmp.eq.s32.totalorder %s18, 3
      %p92 = por %p90, %p91
      %p93 = scmp.ne.s32.totalorder %s84, %s85
      %p94 = scmp.eq.s32.totalorder %s18, 0
      %p95 = por %p93, %p94
      %p96 = scmp.ne.s32.totalorder %s84, %s85
      %p97 = scmp.eq.s32.totalorder %s19, 3
      %p98 = por %p96, %p97
      %p100 = scmp.ne.s32.totalorder %s85, %s99
      %p101 = scmp.eq.s32.totalorder %s19, 0
      %p102 = por %p100, %p101
      %p103 = scmp.le.s32.totalorder 1, %s13
      %p104 = scmp.lt.s32.totalorder %s13, 5
      %p105 = pnand %p103, %p104
      %p106 = pneg %p105
      // Predicated region
      $region9: #{tpu_custom_call.1} parent=5 // pred_check
        _
      $region10: #{tpu_custom_call.1} parent=5 // pred_check_branch
        %108 = sbr.rel (%p105) target = $region12
      $region11: #{tpu_custom_call.1} parent=5 // pred_region
        %s109 = ssub.s32 %s13, 1
      $region12: #{tpu_custom_call.1} parent=5 // pred_fallthru
        _
      %p110 = scmp.lt.s32.totalorder %s13, 4
      // Predicated region
      $region13: #{tpu_custom_call.1} parent=5 // pred_check
        %p111 = pneg %p110
      $region14: #{tpu_custom_call.1} parent=5 // pred_check_branch
        %113 = sbr.rel (%p111) target = $region16
      $region15: #{tpu_custom_call.1} parent=5 // pred_region
        // Predicated region
        $region17: #{tpu_custom_call.1} parent=15 // pred_check
          %p114 = pneg %p47
        $region18: #{tpu_custom_call.1} parent=15 // pred_check_branch
          %116 = sbr.rel (%p114) target = $region20
        $region19: #{tpu_custom_call.1} parent=15 // pred_region
          %s117 = sand.u32 %s37, 1
          %s118 = scalar_lea.sflag [#allocation3], %s117
          %s119 = sand.u32 %s37, 1
          %s120 = smul.addr %s119, 16
          %s121 = scalar_lea.vmem [#allocation2], %s120
          %s123 = ssub.s32 256, 256
          %124 = vsyncadd %s118, %s123
          %s125 = smul.addr %s20, 4
          %s126 = sadd.s32 %s21, %s125
          %s127 = smul.addr %s126, 128
          %s128 = scalar_lea.hbm %s0, %s127
          %s129 = sshll.u32 %s121, 4
          %s130 = int_to_ptr.vmem [resolvable:$true] %s129
          %135 = dma.hbm_to_vmem [thread:$0]  %s128, 256, %s130, %s118, 256, 128, 8
        $region20: #{tpu_custom_call.1} parent=15 // pred_fallthru
          _
      $region16: #{tpu_custom_call.1} parent=5 // pred_fallthru
        _
      %p136 = scmp.le.s32.totalorder 1, %s13
      %p137 = scmp.lt.s32.totalorder %s13, 5
      %p138 = pnand %p136, %p137
      %p139 = pneg %p138
      // Predicated region
      $region21: #{tpu_custom_call.1} parent=5 // pred_check
        _
      $region22: #{tpu_custom_call.1} parent=5 // pred_check_branch
        %141 = sbr.rel (%p138) target = $region24
      $region23: #{tpu_custom_call.1} parent=5 // pred_region
        %s142 = ssub.s32 %s13, 1
        %s143 = sand.u32 %s40, 1
        %s144 = scalar_lea.sflag [#allocation3], %s143
        %s145 = sand.u32 %s40, 1
        %s146 = smul.addr %s145, 16
        %s147 = scalar_lea.vmem [#allocation2], %s146
        // Predicated region
        $region25: #{tpu_custom_call.1} parent=23 // pred_check
          %p148 = pneg %p53
        $region26: #{tpu_custom_call.1} parent=23 // pred_check_branch
          %150 = sbr.rel (%p148) target = $region28
        $region27: #{tpu_custom_call.1} parent=23 // pred_region
          %151 = dma.done %s144, 256
        $region28: #{tpu_custom_call.1} parent=23 // pred_fallthru
          _
        %s152 = sand.u32 %s40, 1
        %s153 = scalar_lea.sflag [#allocation3], %s152
        %s154 = sand.u32 %s40, 1
        %s155 = smul.addr %s154, 16
        %s156 = scalar_lea.vmem [#allocation2], %s155
        %p157 = pneg %p53
        %p158 = pneg %p50
        %p159 = pneg %p74
        %p160 = pneg %p71
        %p161 = pneg %p95
        %p162 = pneg %p92
        %p163 = scmp.eq.s32.totalorder %s22, 0
        %p164 = scmp.eq.s32.totalorder %s23, 0
        %p165 = pnand %p163, %p164
        %p166 = pneg %p165
        // Predicated region
        $region29: #{tpu_custom_call.1} parent=23 // pred_check
          _
        $region30: #{tpu_custom_call.1} parent=23 // pred_check_branch
          %168 = sbr.rel (%p165) target = $region32
        $region31: #{tpu_custom_call.1} parent=23 // pred_region
          %vm169 = vcmask 7168
          %170 = vst.msk [vmem:[%s1] sm:$0xff] %vm169, 0.0
          %171 = vst.msk [vmem:[%s1 + $0x8] sm:$0xff] %vm169, 0.0
          %vm172 = vcmask 130048
          %173 = vst.msk [vmem:[#allocation5] sm:$0xff] %vm172, 0.0
          %174 = vst.msk [vmem:[#allocation5 + $0x8] sm:$0xff] %vm172, 0.0
        $region32: #{tpu_custom_call.1} parent=23 // pred_fallthru
          _
        %v175 = vld [vmem:[%s147] sm:$0xff]
        %v176 = vld [vmem:[%s147 + $0x8] sm:$0xff]
        %v177 = vld [vmem:[%s1] sm:$0xff]
        %v178 = vld [vmem:[%s1 + $0x8] sm:$0xff]
        %179 = vadd.xlane.f32.xlu0 %v175
        %v180 = vpop.xlane.xlu0 %179
        %181 = vadd.xlane.f32.xlu0 %v176
        %v182 = vpop.xlane.xlu0 %181
        %v183 = vadd.f32 %v177, %v180
        %v184 = vadd.f32 %v178, %v182
        %vm185 = vcmask 7168
        %186 = vst.msk [vmem:[%s1] sm:$0xff] %vm185, %v183
        %187 = vst.msk [vmem:[%s1 + $0x8] sm:$0xff] %vm185, %v184
        %v188 = vld [vmem:[#allocation5] sm:$0xff]
        %v189 = vld [vmem:[#allocation5 + $0x8] sm:$0xff]
        %190 = vmatprep.subr.mxu0 0.0
        %191 = vmatpush1.xpose.msra.mxu0 %v175
        %192 = vmatprep.subr.mxu0 0.0
        %193 = vmatpush1.xpose.msra.mxu0 %v176
        %194 = vmatprep.subr.mxu0 0.0
        %195 = vmatpush1.xpose.msra.mxu0 0.0
        %196 = vmatprep.subr.mxu0 0.0
        %197 = vmatpush1.xpose.msra.mxu0 0.0
        %198 = vmatprep.subr.mxu0 0.0
        %199 = vmatpush1.xpose.msra.mxu0 0.0
        %200 = vmatprep.subr.mxu0 0.0
        %201 = vmatpush1.xpose.msra.mxu0 0.0
        %202 = vmatprep.subr.mxu0 0.0
        %203 = vmatpush1.xpose.msra.mxu0 0.0
        %204 = vmatprep.subr.mxu0 0.0
        %205 = vmatpush1.xpose.msra.mxu0 0.0
        %206 = vmatprep.subr.mxu0 0.0
        %207 = vmatpush1.xpose.msra.mxu0 0.0
        %208 = vmatprep.subr.mxu0 0.0
        %209 = vmatpush1.xpose.msra.mxu0 0.0
        %210 = vmatprep.subr.mxu0 0.0
        %211 = vmatpush1.xpose.msra.mxu0 0.0
        %212 = vmatprep.subr.mxu0 0.0
        %213 = vmatpush1.xpose.msra.mxu0 0.0
        %214 = vmatprep.subr.mxu0 0.0
        %215 = vmatpush1.xpose.msra.mxu0 0.0
        %216 = vmatprep.subr.mxu0 0.0
        %217 = vmatpush1.xpose.msra.mxu0 0.0
        %218 = vmatprep.subr.mxu0 0.0
        %219 = vmatpush1.xpose.msra.mxu0 0.0
        %220 = vmatprep.subr.mxu0 0.0
        %221 = vmatpush1.xpose.msra.mxu0 0.0
        %222 = vmatprep.subr.mxu0 0.0
        %223 = vmatpush1.xpose.msra.mxu0 0.0
        %224 = vmatprep.subr.mxu0 0.0
        %225 = vmatpush1.xpose.msra.mxu0 0.0
        %226 = vmatprep.subr.mxu0 0.0
        %227 = vmatpush1.xpose.msra.mxu0 0.0
        %228 = vmatprep.subr.mxu0 0.0
        %229 = vmatpush1.xpose.msra.mxu0 0.0
        %230 = vmatprep.subr.mxu0 0.0
        %231 = vmatpush1.xpose.msra.mxu0 0.0
        %232 = vmatprep.subr.mxu0 0.0
        %233 = vmatpush1.xpose.msra.mxu0 0.0
        %234 = vmatprep.subr.mxu0 0.0
        %235 = vmatpush1.xpose.msra.mxu0 0.0
        %236 = vmatprep.subr.mxu0 0.0
        %237 = vmatpush1.xpose.msra.mxu0 0.0
        %238 = vmatprep.subr.mxu0 0.0
        %239 = vmatpush1.xpose.msra.mxu0 0.0
        %240 = vmatprep.subr.mxu0 0.0
        %241 = vmatpush1.xpose.msra.mxu0 0.0
        %242 = vmatprep.subr.mxu0 0.0
        %243 = vmatpush1.xpose.msra.mxu0 0.0
        %244 = vmatprep.subr.mxu0 0.0
        %245 = vmatpush1.xpose.msra.mxu0 0.0
        %246 = vmatprep.subr.mxu0 0.0
        %247 = vmatpush1.xpose.msra.mxu0 0.0
        %248 = vmatprep.subr.mxu0 0.0
        %249 = vmatpush1.xpose.msra.mxu0 0.0
        %250 = vmatprep.subr.mxu0 0.0
        %251 = vmatpush1.xpose.msra.mxu0 0.0
        %252 = vmatprep.subr.mxu0 0.0
        %253 = vmatpush1.xpose.msra.mxu0 0.0
        %254 = vmatprep.mubr.f32.mxu0 0.0
        %255 = vmatmul.mubr.f32.gmra.mrb[0].mxu0 %v175
        %v256 = vpop.f32.mrb[0].mxu0
        %v257 = vadd.f32 0.0, %v256
        %v258 = vpop.f32.mrb[0].mxu0
        %259 = vmatprep.mubr.f32.mxu0 0.0
        %260 = vmatmul.mubr.f32.gmra.mrb[0].mxu0 %v176
        %v261 = vpop.f32.mrb[0].mxu0
        %v262 = vadd.f32 0.0, %v261
        %v263 = vpop.f32.mrb[0].mxu0
        %264 = vdwg.mxu0
        %v265 = vadd.f32 %v188, %v257
        %v266 = vadd.f32 %v189, %v262
        %vm267 = vcmask 130048
        %268 = vst.msk [vmem:[#allocation5] sm:$0xff] %vm267, %v265
        %269 = vst.msk [vmem:[#allocation5 + $0x8] sm:$0xff] %vm267, %v266
        // Predicated region
        $region33: #{tpu_custom_call.1} parent=23 // pred_check
          %p270 = pneg %p71
        $region34: #{tpu_custom_call.1} parent=23 // pred_check_branch
          %272 = sbr.rel (%p270) target = $region36
        $region35: #{tpu_custom_call.1} parent=23 // pred_region
          _
        $region36: #{tpu_custom_call.1} parent=23 // pred_fallthru
          _
        // Predicated region
        $region37: #{tpu_custom_call.1} parent=23 // pred_check
          %p273 = pneg %p92
        $region38: #{tpu_custom_call.1} parent=23 // pred_check_branch
          %275 = sbr.rel (%p273) target = $region40
        $region39: #{tpu_custom_call.1} parent=23 // pred_region
          %s277 = ssub.s32 256, 256
          %278 = vsyncadd [#allocation4], %s277
          %s279 = sshll.u32 [#allocation5], 4
          %s280 = int_to_ptr.vmem [resolvable:$true] %s279
          %285 = dma.vmem_to_hbm [thread:$0]  %s280, 256, %s2, [#allocation4], 128, 128, 8
        $region40: #{tpu_custom_call.1} parent=23 // pred_fallthru
          _
        // Predicated region
        $region41: #{tpu_custom_call.1} parent=23 // pred_check
          %p286 = pneg %p71
        $region42: #{tpu_custom_call.1} parent=23 // pred_check_branch
          %288 = sbr.rel (%p286) target = $region44
        $region43: #{tpu_custom_call.1} parent=23 // pred_region
          _
        $region44: #{tpu_custom_call.1} parent=23 // pred_fallthru
          _
        // Predicated region
        $region45: #{tpu_custom_call.1} parent=23 // pred_check
          %p289 = pneg %p92
        $region46: #{tpu_custom_call.1} parent=23 // pred_check_branch
          %291 = sbr.rel (%p289) target = $region48
        $region47: #{tpu_custom_call.1} parent=23 // pred_region
          %292 = dma.done [#allocation4], 256
        $region48: #{tpu_custom_call.1} parent=23 // pred_fallthru
          _
      $region24: #{tpu_custom_call.1} parent=5 // pred_fallthru
        _
      %p293 = scmp.le.s32.totalorder 2, %s13
      // Predicated region
      $region49: #{tpu_custom_call.1} parent=5 // pred_check
        %p294 = pneg %p293
      $region50: #{tpu_custom_call.1} parent=5 // pred_check_branch
        %296 = sbr.rel (%p294) target = $region52
      $region51: #{tpu_custom_call.1} parent=5 // pred_region
        %s297 = ssub.s32 %s13, 2
      $region52: #{tpu_custom_call.1} parent=5 // pred_fallthru
        _
    $region6: #{tpu_custom_call.1} parent=1 // loop_footer
      %s17 = sadd.s32 1, %s13
    $region7: #{tpu_custom_call.1} parent=1 // loop_footer_branch
      %12 = sbr.rel target = $region3
    $region8: #{tpu_custom_call.1} parent=1 // loop_exit
      _
    %298 = vsyncpa [#allocation3], 1
    %s299 = scalar_lea.sflag [#allocation3], 1
    %300 = vsyncpa %s299, 1
    %301 = vsyncpa [#allocation4], 1
    %s302 = scalar_lea.sflag [#allocation4], 1
    %303 = vsyncpa %s302, 1

</llo_original>
